<compile_context>
chip_gen: v7x
topology: tpu7x:2x2x1
jax: 0.10.0
libtpu: 0.0.40
codegen_flags: <defaults>
</compile_context>

<pallas_src>
import functools

import jax
import jax.numpy as jnp
from jax.experimental import pallas as pl
from jax.experimental.pallas import tpu as pltpu

K = 3        # kernel_size (fixed by the module)
EPS = 1e-5   # BatchNorm1d default eps


def _causal_resblock_kernel(
    x_ref,          # (B, L, Cin)          compute dtype
    w1f_ref,        # (K*Cin, 2*Cout)      conv1 taps | 1x1 downsample (fused)
    w2f_ref,        # (K*Cout, Cout)
    g1_ref,         # (1, Cout) f32
    be1_ref,        # (1, Cout) f32
    g2_ref,         # (1, Cout) f32
    be2_ref,        # (1, Cout) f32
    bd_ref,         # (1, Cout) f32        downsample bias
    o_ref,          # (B, L, Cout) f32
    pad_ref,        # scratch (B, halo+L, max(Cin, Cout)) compute dtype
    *, dilation, halo):
    B, L, Cin = x_ref.shape
    Cout = o_ref.shape[-1]
    P = (K - 1) * dilation
    cdt = pad_ref.dtype
    cmax = pad_ref.shape[-1]

    def bn_affine(c, g, be):
        # Train-mode BatchNorm1d folded to one affine: one-pass moments over
        # the (batch*length) rows, biased variance, then c*scale + shift.
        n = c.shape[0]
        mu = jnp.sum(c, axis=0, keepdims=True) * (1.0 / n)
        m2 = jnp.sum(c * c, axis=0, keepdims=True) * (1.0 / n)
        var = m2 - mu * mu
        scale = g * jax.lax.rsqrt(var + EPS)
        shift = be - scale * mu
        return c * scale + shift

    def im2col(cw):
        # Gather the K causal taps from the shared pad scratch and lay them
        # out tap-major on the lane axis -> one wide MXU contraction.
        taps = [pad_ref[:, halo - P + k * dilation: halo - P + k * dilation + L, :cw]
                for k in range(K)]
        return jnp.concatenate(taps, axis=-1).reshape(B * L, K * cw)

    # Zero ONLY the P halo rows (full width, shared by both convs), once.
    pad_ref[:, halo - P:halo, :] = jnp.zeros((B, P, cmax), cdt)

    # ---- conv1 (+ fused 1x1 downsample) | bn1 | relu -------------------
    pad_ref[:, halo:halo + L, :Cin] = x_ref[...]
    f1 = jnp.dot(im2col(Cin), w1f_ref[...],
                 preferred_element_type=jnp.float32)          # (B*L, 2*Cout)
    c1 = f1[:, :Cout]
    ident = f1[:, Cout:] + bd_ref[...]                        # residual path
    h = jnp.maximum(bn_affine(c1, g1_ref[...], be1_ref[...]), 0.0)

    # ---- conv2 | bn2 | +identity | relu --------------------------------
    pad_ref[:, halo:halo + L, :Cout] = h.reshape(B, L, Cout).astype(cdt)
    c2 = jnp.dot(im2col(Cout), w2f_ref[...],
                 preferred_element_type=jnp.float32)          # (B*L, Cout)
    out = jnp.maximum(bn_affine(c2, g2_ref[...], be2_ref[...]) + ident, 0.0)
    o_ref[...] = out.reshape(B, L, Cout)


def causal_residual_block_nlc(x, params, dilation=1, is_resid=True,
                              compute_dtype=jnp.float32):
    """Preferred channels-last entry: x (B, L, Cin) -> (B, L, Cout)."""
    B, L, Cin = x.shape
    Cout = params["w1"].shape[0]
    P = (K - 1) * dilation
    halo = max(8, pl.cdiv(P, 8) * 8)          # sublane-aligned payload rows
    cmax = max(Cin, Cout)
    row = lambda v: jnp.asarray(v, jnp.float32).reshape(1, -1)

    # conv1 weight, tap-major rows (k*Cin + i) to match the im2col layout.
    w1_r = jnp.transpose(params["w1"], (2, 1, 0)).reshape(K * Cin, Cout)
    # Identity/downsample path folded in as extra output columns that only
    # touch the unshifted (k = K-1) tap block.
    if not is_resid:
        wd = jnp.zeros((Cin, Cout), jnp.float32)
        bd = jnp.zeros((Cout,), jnp.float32)
    elif params.get("wd") is not None:
        wd = jnp.transpose(params["wd"][:, :, 0], (1, 0))     # (Cin, Cout)
        bd = params["bd"]
    else:  # Cin == Cout and is_resid: plain identity residual
        wd = jnp.eye(Cin, Cout, dtype=jnp.float32)
        bd = jnp.zeros((Cout,), jnp.float32)
    wd_rows = jnp.zeros((K * Cin, Cout), jnp.float32).at[(K - 1) * Cin:].set(wd)
    w1f = jnp.concatenate([w1_r, wd_rows], axis=1)            # (K*Cin, 2*Cout)
    w2f = jnp.transpose(params["w2"], (2, 1, 0)).reshape(K * Cout, Cout)
    # NOTE: conv biases b1/b2 are intentionally dropped — they cancel exactly
    # under batch-statistic BatchNorm.

    kernel = functools.partial(_causal_resblock_kernel,
                               dilation=dilation, halo=halo)
    return pl.pallas_call(
        kernel,
        out_shape=jax.ShapeDtypeStruct((B, L, Cout), jnp.float32),
        in_specs=[pl.BlockSpec(memory_space=pltpu.MemorySpace.VMEM)] * 8,
        out_specs=pl.BlockSpec(memory_space=pltpu.MemorySpace.VMEM),
        scratch_shapes=[pltpu.VMEM((B, halo + L, cmax), compute_dtype)],
    )(x.astype(compute_dtype),
      w1f.astype(compute_dtype),
      w2f.astype(compute_dtype),
      row(params["g1"]), row(params["be1"]),
      row(params["g2"]), row(params["be2"]),
      row(bd))


def causal_residual_block(x_ncl, params, dilation=1, is_resid=True,
                          compute_dtype=jnp.float32):
    """PyTorch-parity adapter: x (B, Cin, L) -> (B, Cout, L)."""
    x = jnp.transpose(x_ncl, (0, 2, 1))
    out = causal_residual_block_nlc(x, params, dilation, is_resid, compute_dtype)
    return jnp.transpose(out, (0, 2, 1))


def reference(x_ncl, params, dilation=1):
    """Pure-JAX reference mirroring the PyTorch forward (NCL layout, f32)."""
    P = (K - 1) * dilation
    L = x_ncl.shape[2]

    def conv1d(x, w, b):  # x (B,Ci,L), w (Co,Ci,K)
        xp = jnp.pad(x, ((0, 0), (0, 0), (P, 0)))
        out = jnp.zeros((x.shape[0], w.shape[0], L), jnp.float32)
        for k in range(K):
            out = out + jnp.einsum(
                "oi,bil->bol", w[:, :, k],
                xp[:, :, k * dilation:k * dilation + L])
        return out + b[None, :, None]

    def bn(h, g, be):
        mu = jnp.mean(h, axis=(0, 2), keepdims=True)
        var = jnp.mean((h - mu) ** 2, axis=(0, 2), keepdims=True)
        return (g[None, :, None] * (h - mu) / jnp.sqrt(var + EPS)
                + be[None, :, None])

    h = jax.nn.relu(bn(conv1d(x_ncl, params["w1"], params["b1"]),
                       params["g1"], params["be1"]))
    h = bn(conv1d(h, params["w2"], params["b2"]), params["g2"], params["be2"])
    ident = (jnp.einsum("oi,bil->bol", params["wd"][:, :, 0], x_ncl)
             + params["bd"][None, :, None])
    return jax.nn.relu(h + ident)


def _make_params(key, Cin, Cout):
    ks = jax.random.split(key, 11)
    return {
        "w1": 0.2 * jax.random.normal(ks[0], (Cout, Cin, K), jnp.float32),
        "b1": 0.1 * jax.random.normal(ks[1], (Cout,), jnp.float32),
        "g1": 1.0 + 0.1 * jax.random.normal(ks[2], (Cout,), jnp.float32),
        "be1": 0.1 * jax.random.normal(ks[3], (Cout,), jnp.float32),
        "w2": 0.2 * jax.random.normal(ks[4], (Cout, Cout, K), jnp.float32),
        "b2": 0.1 * jax.random.normal(ks[5], (Cout,), jnp.float32),
        "g2": 1.0 + 0.1 * jax.random.normal(ks[6], (Cout,), jnp.float32),
        "be2": 0.1 * jax.random.normal(ks[7], (Cout,), jnp.float32),
        "wd": 0.2 * jax.random.normal(ks[8], (Cout, Cin, 1), jnp.float32),
        "bd": 0.1 * jax.random.normal(ks[9], (Cout,), jnp.float32),
    }


if __name__ == "__main__":
    key = jax.random.PRNGKey(0)
    k_p, k_x, k_p2, k_x2 = jax.random.split(key, 4)

    # --- Case 1: in_filters != out_filters -> learned 1x1 downsample -----
    B, Cin, Cout, L = 2, 4, 8, 16
    dilation = 1
    params = _make_params(k_p, Cin, Cout)
    x = jax.random.normal(k_x, (B, Cin, L), jnp.float32)

    ref = reference(x, params, dilation=dilation)
    out = jax.block_until_ready(causal_residual_block(x, params, dilation=dilation))
    assert out.shape == (B, Cout, L), out.shape
    assert jnp.allclose(out, ref, atol=1e-4, rtol=1e-4), \
        float(jnp.max(jnp.abs(out - ref)))

    # bf16 MXU-input path (v6e/v7x fast path): coarse sanity bound only.
    out_bf16 = jax.block_until_ready(
        causal_residual_block(x, params, dilation=dilation,
                              compute_dtype=jnp.bfloat16))
    assert out_bf16.shape == (B, Cout, L), out_bf16.shape
    assert jnp.allclose(out_bf16, ref, atol=2e-1, rtol=2e-1), \
        float(jnp.max(jnp.abs(out_bf16 - ref)))

    # --- Case 2: in_filters == out_filters -> identity residual ----------
    C2 = 8
    params2 = _make_params(k_p2, C2, C2)
    params2["wd"] = None  # module has no downsample in this configuration
    x2 = jax.random.normal(k_x2, (B, C2, L), jnp.float32)
    ref_params2 = dict(params2)
    ref_params2["wd"] = jnp.eye(C2, dtype=jnp.float32)[:, :, None]
    ref_params2["bd"] = jnp.zeros((C2,), jnp.float32)
    ref2 = reference(x2, ref_params2, dilation=dilation)
    out2 = jax.block_until_ready(
        causal_residual_block(x2, params2, dilation=dilation))
    assert out2.shape == (B, C2, L), out2.shape
    assert jnp.allclose(out2, ref2, atol=1e-4, rtol=1e-4), \
        float(jnp.max(jnp.abs(out2 - ref2)))

    print("KERNEL_OK")
</pallas_src>

<mosaic_0001>
module attributes {stable_mosaic.version = 11 : i64} {
  func.func @_causal_resblock_kernel(%arg0: memref<2x16x4xf32, #tpu.memory_space<vmem>>, %arg1: memref<12x16xf32, #tpu.memory_space<vmem>>, %arg2: memref<24x8xf32, #tpu.memory_space<vmem>>, %arg3: memref<1x8xf32, #tpu.memory_space<vmem>>, %arg4: memref<1x8xf32, #tpu.memory_space<vmem>>, %arg5: memref<1x8xf32, #tpu.memory_space<vmem>>, %arg6: memref<1x8xf32, #tpu.memory_space<vmem>>, %arg7: memref<1x8xf32, #tpu.memory_space<vmem>>, %arg8: memref<2x16x8xf32, #tpu.memory_space<vmem>>, %arg9: memref<2x24x8xf32, #tpu.memory_space<vmem>>) attributes {dimension_semantics = [], scalar_prefetch = 0 : i64, scratch_operands = 1 : i64, tpu.core_type = #tpu.core_type<tc>} {
    %cst = arith.constant 0.000000e+00 : f32
    %0 = vector.broadcast %cst : f32 to vector<2x2x8xf32>
    %c0 = arith.constant 0 : index
    %c6 = arith.constant 6 : index
    %c0_0 = arith.constant 0 : index
    %1 = vector.load %arg9[%c0, %c6, %c0_0] : memref<2x24x8xf32, #tpu.memory_space<vmem>>, vector<2x2x8xf32>
    tpu.vector_store %arg9[%c0, %c6, %c0_0], %0 {strides = array<i32>} : memref<2x24x8xf32, #tpu.memory_space<vmem>>, vector<2x2x8xf32>,
    %c0_1 = arith.constant 0 : index
    %c0_2 = arith.constant 0 : index
    %c0_3 = arith.constant 0 : index
    %2 = vector.load %arg0[%c0_1, %c0_2, %c0_3] : memref<2x16x4xf32, #tpu.memory_space<vmem>>, vector<2x16x4xf32>
    %c0_4 = arith.constant 0 : index
    %c8 = arith.constant 8 : index
    %c0_5 = arith.constant 0 : index
    %3 = vector.load %arg9[%c0_4, %c8, %c0_5] : memref<2x24x8xf32, #tpu.memory_space<vmem>>, vector<2x16x4xf32>
    tpu.vector_store %arg9[%c0_4, %c8, %c0_5], %2 {strides = array<i32>} : memref<2x24x8xf32, #tpu.memory_space<vmem>>, vector<2x16x4xf32>,
    %c0_6 = arith.constant 0 : index
    %c6_7 = arith.constant 6 : index
    %c0_8 = arith.constant 0 : index
    %4 = vector.load %arg9[%c0_6, %c6_7, %c0_8] : memref<2x24x8xf32, #tpu.memory_space<vmem>>, vector<2x16x4xf32>
    %c0_9 = arith.constant 0 : index
    %c7 = arith.constant 7 : index
    %c0_10 = arith.constant 0 : index
    %5 = vector.load %arg9[%c0_9, %c7, %c0_10] : memref<2x24x8xf32, #tpu.memory_space<vmem>>, vector<2x16x4xf32>
    %c0_11 = arith.constant 0 : index
    %c8_12 = arith.constant 8 : index
    %c0_13 = arith.constant 0 : index
    %6 = vector.load %arg9[%c0_11, %c8_12, %c0_13] : memref<2x24x8xf32, #tpu.memory_space<vmem>>, vector<2x16x4xf32>
    %7 = tpu.concatenate %4, %5, %6 in 2 : vector<2x16x4xf32>, vector<2x16x4xf32>, vector<2x16x4xf32> -> vector<2x16x12xf32>
    %8 = vector.shape_cast %7 : vector<2x16x12xf32> to vector<32x12xf32>
    %c0_14 = arith.constant 0 : index
    %c0_15 = arith.constant 0 : index
    %9 = vector.load %arg1[%c0_14, %c0_15] : memref<12x16xf32, #tpu.memory_space<vmem>>, vector<12x16xf32>
    %cst_16 = arith.constant dense<0.000000e+00> : vector<32x16xf32>
    %10 = tpu.matmul %8, %9, %cst_16 {dimension_numbers = #tpu.dot_dimension_numbers<[1], [0], [0], [1], [0, 0, 1, 1], [], []>} : vector<32x12xf32>, vector<12x16xf32>, vector<32x16xf32> -> vector<32x16xf32>
    %11 = vector.extract_strided_slice %10 {offsets = [0, 0], sizes = [32, 8], strides = [1, 1]} : vector<32x16xf32> to vector<32x8xf32>
    %12 = vector.extract_strided_slice %10 {offsets = [0, 8], sizes = [32, 8], strides = [1, 1]} : vector<32x16xf32> to vector<32x8xf32>
    %c0_17 = arith.constant 0 : index
    %c0_18 = arith.constant 0 : index
    %13 = vector.load %arg7[%c0_17, %c0_18] : memref<1x8xf32, #tpu.memory_space<vmem>>, vector<1x8xf32>
    %14 = vector.broadcast %13 : vector<1x8xf32> to vector<32x8xf32>
    %15 = arith.addf %12, %14 : vector<32x8xf32>
    %c0_19 = arith.constant 0 : index
    %c0_20 = arith.constant 0 : index
    %16 = vector.load %arg3[%c0_19, %c0_20] : memref<1x8xf32, #tpu.memory_space<vmem>>, vector<1x8xf32>
    %c0_21 = arith.constant 0 : index
    %c0_22 = arith.constant 0 : index
    %17 = vector.load %arg4[%c0_21, %c0_22] : memref<1x8xf32, #tpu.memory_space<vmem>>, vector<1x8xf32>
    %cst_23 = arith.constant dense<0.000000e+00> : vector<8xf32>
    %18 = vector.multi_reduction <add>, %11, %cst_23 [0] : vector<32x8xf32> to vector<8xf32>
    %19 = vector.shape_cast %18 : vector<8xf32> to vector<1x8xf32>
    %cst_24 = arith.constant 3.125000e-02 : f32
    %20 = vector.broadcast %cst_24 : f32 to vector<1x8xf32>
    %21 = arith.mulf %19, %20 : vector<1x8xf32>
    %22 = arith.mulf %11, %11 : vector<32x8xf32>
    %cst_25 = arith.constant dense<0.000000e+00> : vector<8xf32>
    %23 = vector.multi_reduction <add>, %22, %cst_25 [0] : vector<32x8xf32> to vector<8xf32>
    %24 = vector.shape_cast %23 : vector<8xf32> to vector<1x8xf32>
    %cst_26 = arith.constant 3.125000e-02 : f32
    %25 = vector.broadcast %cst_26 : f32 to vector<1x8xf32>
    %26 = arith.mulf %24, %25 : vector<1x8xf32>
    %27 = arith.mulf %21, %21 : vector<1x8xf32>
    %28 = arith.subf %26, %27 : vector<1x8xf32>
    %cst_27 = arith.constant 9.99999974E-6 : f32
    %29 = vector.broadcast %cst_27 : f32 to vector<1x8xf32>
    %30 = arith.addf %28, %29 : vector<1x8xf32>
    %31 = math.rsqrt %30 : vector<1x8xf32>
    %32 = arith.mulf %16, %31 : vector<1x8xf32>
    %33 = arith.mulf %32, %21 : vector<1x8xf32>
    %34 = arith.subf %17, %33 : vector<1x8xf32>
    %35 = vector.broadcast %32 : vector<1x8xf32> to vector<32x8xf32>
    %36 = arith.mulf %11, %35 : vector<32x8xf32>
    %37 = vector.broadcast %34 : vector<1x8xf32> to vector<32x8xf32>
    %38 = arith.addf %36, %37 : vector<32x8xf32>
    %cst_28 = arith.constant 0.000000e+00 : f32
    %39 = vector.broadcast %cst_28 : f32 to vector<32x8xf32>
    %40 = arith.maximumf %38, %39 : vector<32x8xf32>
    %41 = vector.shape_cast %40 : vector<32x8xf32> to vector<2x16x8xf32>
    %c0_29 = arith.constant 0 : index
    %c8_30 = arith.constant 8 : index
    %c0_31 = arith.constant 0 : index
    %42 = vector.load %arg9[%c0_29, %c8_30, %c0_31] : memref<2x24x8xf32, #tpu.memory_space<vmem>>, vector<2x16x8xf32>
    tpu.vector_store %arg9[%c0_29, %c8_30, %c0_31], %41 {strides = array<i32>} : memref<2x24x8xf32, #tpu.memory_space<vmem>>, vector<2x16x8xf32>,
    %c0_32 = arith.constant 0 : index
    %c6_33 = arith.constant 6 : index
    %c0_34 = arith.constant 0 : index
    %43 = vector.load %arg9[%c0_32, %c6_33, %c0_34] : memref<2x24x8xf32, #tpu.memory_space<vmem>>, vector<2x16x8xf32>
    %c0_35 = arith.constant 0 : index
    %c7_36 = arith.constant 7 : index
    %c0_37 = arith.constant 0 : index
    %44 = vector.load %arg9[%c0_35, %c7_36, %c0_37] : memref<2x24x8xf32, #tpu.memory_space<vmem>>, vector<2x16x8xf32>
    %c0_38 = arith.constant 0 : index
    %c8_39 = arith.constant 8 : index
    %c0_40 = arith.constant 0 : index
    %45 = vector.load %arg9[%c0_38, %c8_39, %c0_40] : memref<2x24x8xf32, #tpu.memory_space<vmem>>, vector<2x16x8xf32>
    %46 = tpu.concatenate %43, %44, %45 in 2 : vector<2x16x8xf32>, vector<2x16x8xf32>, vector<2x16x8xf32> -> vector<2x16x24xf32>
    %47 = vector.shape_cast %46 : vector<2x16x24xf32> to vector<32x24xf32>
    %c0_41 = arith.constant 0 : index
    %c0_42 = arith.constant 0 : index
    %48 = vector.load %arg2[%c0_41, %c0_42] : memref<24x8xf32, #tpu.memory_space<vmem>>, vector<24x8xf32>
    %cst_43 = arith.constant dense<0.000000e+00> : vector<32x8xf32>
    %49 = tpu.matmul %47, %48, %cst_43 {dimension_numbers = #tpu.dot_dimension_numbers<[1], [0], [0], [1], [0, 0, 1, 1], [], []>} : vector<32x24xf32>, vector<24x8xf32>, vector<32x8xf32> -> vector<32x8xf32>
    %c0_44 = arith.constant 0 : index
    %c0_45 = arith.constant 0 : index
    %50 = vector.load %arg5[%c0_44, %c0_45] : memref<1x8xf32, #tpu.memory_space<vmem>>, vector<1x8xf32>
    %c0_46 = arith.constant 0 : index
    %c0_47 = arith.constant 0 : index
    %51 = vector.load %arg6[%c0_46, %c0_47] : memref<1x8xf32, #tpu.memory_space<vmem>>, vector<1x8xf32>
    %cst_48 = arith.constant dense<0.000000e+00> : vector<8xf32>
    %52 = vector.multi_reduction <add>, %49, %cst_48 [0] : vector<32x8xf32> to vector<8xf32>
    %53 = vector.shape_cast %52 : vector<8xf32> to vector<1x8xf32>
    %cst_49 = arith.constant 3.125000e-02 : f32
    %54 = vector.broadcast %cst_49 : f32 to vector<1x8xf32>
    %55 = arith.mulf %53, %54 : vector<1x8xf32>
    %56 = arith.mulf %49, %49 : vector<32x8xf32>
    %cst_50 = arith.constant dense<0.000000e+00> : vector<8xf32>
    %57 = vector.multi_reduction <add>, %56, %cst_50 [0] : vector<32x8xf32> to vector<8xf32>
    %58 = vector.shape_cast %57 : vector<8xf32> to vector<1x8xf32>
    %cst_51 = arith.constant 3.125000e-02 : f32
    %59 = vector.broadcast %cst_51 : f32 to vector<1x8xf32>
    %60 = arith.mulf %58, %59 : vector<1x8xf32>
    %61 = arith.mulf %55, %55 : vector<1x8xf32>
    %62 = arith.subf %60, %61 : vector<1x8xf32>
    %cst_52 = arith.constant 9.99999974E-6 : f32
    %63 = vector.broadcast %cst_52 : f32 to vector<1x8xf32>
    %64 = arith.addf %62, %63 : vector<1x8xf32>
    %65 = math.rsqrt %64 : vector<1x8xf32>
    %66 = arith.mulf %50, %65 : vector<1x8xf32>
    %67 = arith.mulf %66, %55 : vector<1x8xf32>
    %68 = arith.subf %51, %67 : vector<1x8xf32>
    %69 = vector.broadcast %66 : vector<1x8xf32> to vector<32x8xf32>
    %70 = arith.mulf %49, %69 : vector<32x8xf32>
    %71 = vector.broadcast %68 : vector<1x8xf32> to vector<32x8xf32>
    %72 = arith.addf %70, %71 : vector<32x8xf32>
    %73 = arith.addf %72, %15 : vector<32x8xf32>
    %cst_53 = arith.constant 0.000000e+00 : f32
    %74 = vector.broadcast %cst_53 : f32 to vector<32x8xf32>
    %75 = arith.maximumf %73, %74 : vector<32x8xf32>
    %76 = vector.shape_cast %75 : vector<32x8xf32> to vector<2x16x8xf32>
    %c0_54 = arith.constant 0 : index
    %c0_55 = arith.constant 0 : index
    %c0_56 = arith.constant 0 : index
    %77 = vector.load %arg8[%c0_54, %c0_55, %c0_56] : memref<2x16x8xf32, #tpu.memory_space<vmem>>, vector<2x16x8xf32>
    tpu.vector_store %arg8[%c0_54, %c0_55, %c0_56], %76 {strides = array<i32>} : memref<2x16x8xf32, #tpu.memory_space<vmem>>, vector<2x16x8xf32>,
    return
  }
}

</mosaic_0001>

<llo_original>
// kernel: tpu_custom_call.1
$region0: #{tpu_custom_call.1}
  #allocation0 [shape = 'u32[]', space=smem, size = 0x4, offset = 0x4, fixed_abs, tag = 'smem constant byte address 0x4 - core index']
  #allocation1 [shape = 'u32[144,128]{1,0:T(1,128)}', space=vmem, size = 0x12000, scoped, tag = 'internal scratch']
  #allocation2 [shape = 'f32[2,24,8]{2,1,0:T(8,128)}', space=vmem, size = 0x6000, scoped, tag = 'scratch operand']
  %s0 = inlined_call_operand.vmem [shape: f32[2,16,4], index: 0, kind: input, shape index: {}]
  %s1 = inlined_call_operand.vmem [shape: f32[12,16], index: 1, kind: input, shape index: {}]
  %s2 = inlined_call_operand.vmem [shape: f32[24,8], index: 2, kind: input, shape index: {}]
  %s3 = inlined_call_operand.vmem [shape: f32[1,8], index: 3, kind: input, shape index: {}]
  %s4 = inlined_call_operand.vmem [shape: f32[1,8], index: 4, kind: input, shape index: {}]
  %s5 = inlined_call_operand.vmem [shape: f32[1,8], index: 5, kind: input, shape index: {}]
  %s6 = inlined_call_operand.vmem [shape: f32[1,8], index: 6, kind: input, shape index: {}]
  %s7 = inlined_call_operand.vmem [shape: f32[1,8], index: 7, kind: input, shape index: {}]
  %s8 = inlined_call_operand.vmem [shape: f32[2,16,8], index: 8, kind: output, shape index: {}]
  %s9 = sld [smem:[#allocation0]]
  $region42: #{tpu_custom_call.1} parent=0
    _
  %s11 = ssub.s32 1, %s9
  %s12 = scalar_select 0, %s11, %s9
  // Predicated region
  $region2: #{tpu_custom_call.1} parent=0 // pred_check
    _
  $region3: #{tpu_custom_call.1} parent=0 // pred_check_branch
    %14 = sbr.rel (0) target = $region5
  $region4: #{tpu_custom_call.1} parent=0 // pred_region
    _
  $region5: #{tpu_custom_call.1} parent=0 // pred_fallthru
    _
  // Predicated region
  $region6: #{tpu_custom_call.1} parent=0 // pred_check
    _
  $region7: #{tpu_custom_call.1} parent=0 // pred_check_branch
    %16 = sbr.rel (0) target = $region9
  $region8: #{tpu_custom_call.1} parent=0 // pred_region
    _
  $region9: #{tpu_custom_call.1} parent=0 // pred_fallthru
    _
  // Predicated region
  $region10: #{tpu_custom_call.1} parent=0 // pred_check
    _
  $region11: #{tpu_custom_call.1} parent=0 // pred_check_branch
    %18 = sbr.rel (0) target = $region13
  $region12: #{tpu_custom_call.1} parent=0 // pred_region
    _
  $region13: #{tpu_custom_call.1} parent=0 // pred_fallthru
    _
  // Predicated region
  $region14: #{tpu_custom_call.1} parent=0 // pred_check
    _
  $region15: #{tpu_custom_call.1} parent=0 // pred_check_branch
    %20 = sbr.rel (0) target = $region17
  $region16: #{tpu_custom_call.1} parent=0 // pred_region
    _
  $region17: #{tpu_custom_call.1} parent=0 // pred_fallthru
    _
  // Predicated region
  $region18: #{tpu_custom_call.1} parent=0 // pred_check
    _
  $region19: #{tpu_custom_call.1} parent=0 // pred_check_branch
    %22 = sbr.rel (0) target = $region21
  $region20: #{tpu_custom_call.1} parent=0 // pred_region
    _
  $region21: #{tpu_custom_call.1} parent=0 // pred_fallthru
    _
  // Predicated region
  $region22: #{tpu_custom_call.1} parent=0 // pred_check
    _
  $region23: #{tpu_custom_call.1} parent=0 // pred_check_branch
    %24 = sbr.rel (0) target = $region25
  $region24: #{tpu_custom_call.1} parent=0 // pred_region
    _
  $region25: #{tpu_custom_call.1} parent=0 // pred_fallthru
    _
  // Predicated region
  $region26: #{tpu_custom_call.1} parent=0 // pred_check
    _
  $region27: #{tpu_custom_call.1} parent=0 // pred_check_branch
    %26 = sbr.rel (0) target = $region29
  $region28: #{tpu_custom_call.1} parent=0 // pred_region
    _
  $region29: #{tpu_custom_call.1} parent=0 // pred_fallthru
    _
  // Predicated region
  $region30: #{tpu_custom_call.1} parent=0 // pred_check
    _
  $region31: #{tpu_custom_call.1} parent=0 // pred_check_branch
    %28 = sbr.rel (0) target = $region33
  $region32: #{tpu_custom_call.1} parent=0 // pred_region
    _
  $region33: #{tpu_custom_call.1} parent=0 // pred_fallthru
    _
  %vm29 = vcmask 58368
  %30 = vst.msk [vmem:[#allocation2 + $0x6] sm:$0x3] %vm29, 0.0
  %31 = vst.msk [vmem:[#allocation2 + $0x1e] sm:$0x3] %vm29, 0.0
  %v32 = vld [vmem:[%s0] sm:$0xff]
  %v33 = vld [vmem:[%s0 + $0x8] sm:$0xff]
  %v34 = vld [vmem:[%s0 + $0x10] sm:$0xff]
  %v35 = vld [vmem:[%s0 + $0x18] sm:$0xff]
  %vm36 = vcmask 31744
  %37 = vst.msk [vmem:[#allocation2 + $0x8] sm:$0xff] %vm36, %v32
  %38 = vst.msk [vmem:[#allocation2 + $0x10] sm:$0xff] %vm36, %v33
  %39 = vst.msk [vmem:[#allocation2 + $0x20] sm:$0xff] %vm36, %v34
  %40 = vst.msk [vmem:[#allocation2 + $0x28] sm:$0xff] %vm36, %v35
  %v41 = vld [vmem:[#allocation2 + $0x6] sm:$0xff]
  %v42 = vld [vmem:[#allocation2 + $0xe] sm:$0xff]
  %v43 = vld [vmem:[#allocation2 + $0x1e] sm:$0xff]
  %v44 = vld [vmem:[#allocation2 + $0x26] sm:$0xff]
  %v45 = vld [vmem:[#allocation2 + $0x7] sm:$0xff]
  %v46 = vld [vmem:[#allocation2 + $0xf] sm:$0xff]
  %v47 = vld [vmem:[#allocation2 + $0x1f] sm:$0xff]
  %v48 = vld [vmem:[#allocation2 + $0x27] sm:$0xff]
  %v49 = vld [vmem:[#allocation2 + $0x8] sm:$0xff]
  %v50 = vld [vmem:[#allocation2 + $0x10] sm:$0xff]
  %v51 = vld [vmem:[#allocation2 + $0x20] sm:$0xff]
  %v52 = vld [vmem:[#allocation2 + $0x28] sm:$0xff]
  %57 = vrot.lane.b32.xlu0 %v45, 4
  %v58 = vpop.permute.xlu0 %57
  %59 = vrot.lane.b32.xlu0 %v46, 4
  %v60 = vpop.permute.xlu0 %59
  %61 = vrot.lane.b32.xlu0 %v47, 4
  %v62 = vpop.permute.xlu0 %61
  %63 = vrot.lane.b32.xlu0 %v48, 4
  %v64 = vpop.permute.xlu0 %63
  %73 = vrot.lane.b32.xlu0 %v49, 8
  %v74 = vpop.permute.xlu0 %73
  %75 = vrot.lane.b32.xlu0 %v50, 8
  %v76 = vpop.permute.xlu0 %75
  %77 = vrot.lane.b32.xlu0 %v51, 8
  %v78 = vpop.permute.xlu0 %77
  %79 = vrot.lane.b32.xlu0 %v52, 8
  %v80 = vpop.permute.xlu0 %79
  %v85 = vsel %vm36, %v41, %v58
  %v86 = vsel %vm36, %v42, %v60
  %v87 = vsel %vm36, %v43, %v62
  %v88 = vsel %vm36, %v44, %v64
  %vm89 = vcmask 64512
  %v90 = vsel %vm89, %v85, %v74
  %v91 = vsel %vm89, %v86, %v76
  %v92 = vsel %vm89, %v87, %v78
  %v93 = vsel %vm89, %v88, %v80
  %v94 = vld [vmem:[%s1] sm:$0xff]
  %v95 = vld [vmem:[%s1 + $0x8] sm:$0xf]
  %vm96 = vcmask 97280
  %v98 = vsel %vm96, %v90, 0
  %v101 = vsel %vm96, %v91, 0
  %v104 = vsel %vm96, %v92, 0
  %v107 = vsel %vm96, %v93, 0
  %vm109 = vcmask 1043456
  %v111 = vsel %vm109, %v95, 0
  %113 = vmatprep.subr.mxu0 0.0
  %114 = vmatpush1.msra.mxu0 %v94
  %115 = vmatprep.subr.mxu0 0.0
  %116 = vmatpush1.msra.mxu0 %v111
  %117 = vmatprep.subr.mxu0 0.0
  %118 = vmatpush1.msra.mxu0 0.0
  %119 = vmatprep.subr.mxu0 0.0
  %120 = vmatpush1.msra.mxu0 0.0
  %121 = vmatprep.subr.mxu0 0.0
  %122 = vmatpush1.msra.mxu0 0.0
  %123 = vmatprep.subr.mxu0 0.0
  %124 = vmatpush1.msra.mxu0 0.0
  %125 = vmatprep.subr.mxu0 0.0
  %126 = vmatpush1.msra.mxu0 0.0
  %127 = vmatprep.subr.mxu0 0.0
  %128 = vmatpush1.msra.mxu0 0.0
  %129 = vmatprep.subr.mxu0 0.0
  %130 = vmatpush1.msra.mxu0 0.0
  %131 = vmatprep.subr.mxu0 0.0
  %132 = vmatpush1.msra.mxu0 0.0
  %133 = vmatprep.subr.mxu0 0.0
  %134 = vmatpush1.msra.mxu0 0.0
  %135 = vmatprep.subr.mxu0 0.0
  %136 = vmatpush1.msra.mxu0 0.0
  %137 = vmatprep.subr.mxu0 0.0
  %138 = vmatpush1.msra.mxu0 0.0
  %139 = vmatprep.subr.mxu0 0.0
  %140 = vmatpush1.msra.mxu0 0.0
  %141 = vmatprep.subr.mxu0 0.0
  %142 = vmatpush1.msra.mxu0 0.0
  %143 = vmatprep.subr.mxu0 0.0
  %144 = vmatpush1.msra.mxu0 0.0
  %145 = vmatprep.subr.mxu0 0.0
  %146 = vmatpush1.msra.mxu0 0.0
  %147 = vmatprep.subr.mxu0 0.0
  %148 = vmatpush1.msra.mxu0 0.0
  %149 = vmatprep.subr.mxu0 0.0
  %150 = vmatpush1.msra.mxu0 0.0
  %151 = vmatprep.subr.mxu0 0.0
  %152 = vmatpush1.msra.mxu0 0.0
  %153 = vmatprep.subr.mxu0 0.0
  %154 = vmatpush1.msra.mxu0 0.0
  %155 = vmatprep.subr.mxu0 0.0
  %156 = vmatpush1.msra.mxu0 0.0
  %157 = vmatprep.subr.mxu0 0.0
  %158 = vmatpush1.msra.mxu0 0.0
  %159 = vmatprep.subr.mxu0 0.0
  %160 = vmatpush1.msra.mxu0 0.0
  %161 = vmatprep.subr.mxu0 0.0
  %162 = vmatpush1.msra.mxu0 0.0
  %163 = vmatprep.subr.mxu0 0.0
  %164 = vmatpush1.msra.mxu0 0.0
  %165 = vmatprep.subr.mxu0 0.0
  %166 = vmatpush1.msra.mxu0 0.0
  %167 = vmatprep.subr.mxu0 0.0
  %168 = vmatpush1.msra.mxu0 0.0
  %169 = vmatprep.subr.mxu0 0.0
  %170 = vmatpush1.msra.mxu0 0.0
  %171 = vmatprep.subr.mxu0 0.0
  %172 = vmatpush1.msra.mxu0 0.0
  %173 = vmatprep.subr.mxu0 0.0
  %174 = vmatpush1.msra.mxu0 0.0
  %175 = vmatprep.subr.mxu0 0.0
  %176 = vmatpush1.msra.mxu0 0.0
  %177 = vmatprep.mubr.f32.mxu0 0.0
  %178 = vmatmul.mubr.f32.gmra.mrb[0].mxu0 %v98
  %v179 = vpop.f32.mrb[0].mxu0
  %v180 = vadd.f32 0.0, %v179
  %v181 = vpop.f32.mrb[0].mxu0
  %182 = vmatprep.mubr.f32.mxu0 0.0
  %183 = vmatmul.mubr.f32.gmra.mrb[0].mxu0 %v101
  %v184 = vpop.f32.mrb[0].mxu0
  %v185 = vadd.f32 0.0, %v184
  %v186 = vpop.f32.mrb[0].mxu0
  %187 = vmatprep.mubr.f32.mxu0 0.0
  %188 = vmatmul.mubr.f32.gmra.mrb[0].mxu0 %v104
  %v189 = vpop.f32.mrb[0].mxu0
  %v190 = vadd.f32 0.0, %v189
  %v191 = vpop.f32.mrb[0].mxu0
  %192 = vmatprep.mubr.f32.mxu0 0.0
  %193 = vmatmul.mubr.f32.gmra.mrb[0].mxu0 %v107
  %v194 = vpop.f32.mrb[0].mxu0
  %v195 = vadd.f32 0.0, %v194
  %v196 = vpop.f32.mrb[0].mxu0
  %197 = vdwg.mxu0
  %v198 = vld [vmem:[%s7] sm:$0x1]
  %v200 = vlaneseq
  %v201 = vshrl.u32 %v200, 7
  %v202 = vsub.s32 0, %v201
  %v203 = vrot.slane %v198, %v202
  %204 = vrot.lane.b32.xlu0 %v203, 8
  %v205 = vpop.permute.xlu0 %204
  %v207 = vadd.f32 %v180, %v205
  %v208 = vadd.f32 %v185, %v205
  %v209 = vadd.f32 %v190, %v205
  %v210 = vadd.f32 %v195, %v205
  %v211 = vld [vmem:[%s3] sm:$0x1]
  %v212 = vld [vmem:[%s4] sm:$0x1]
  %v213 = vsel %vm89, %v180, 0.0
  %v214 = vsel %vm89, %v185, 0.0
  %v215 = vadd.f32 %v213, %v214
  %v216 = vsel %vm89, %v190, 0.0
  %v217 = vadd.f32 %v215, %v216
  %v218 = vsel %vm89, %v195, 0.0
  %v219 = vadd.f32 %v217, %v218
  %v220 = vrot.slane %v219, 4
  %v221 = vadd.f32 %v219, %v220
  %v222 = vrot.slane %v221, 2
  %v223 = vadd.f32 %v221, %v222
  %v224 = vrot.slane %v223, 1
  %v225 = vadd.f32 %v223, %v224
  %v226 = vmul.f32 %v225, 0.03125
  %v227 = vmul.f32 %v180, %v180
  %v228 = vmul.f32 %v185, %v185
  %v229 = vmul.f32 %v190, %v190
  %v230 = vmul.f32 %v195, %v195
  %v231 = vsel %vm89, %v227, 0.0
  %v232 = vsel %vm89, %v228, 0.0
  %v233 = vadd.f32 %v231, %v232
  %v234 = vsel %vm89, %v229, 0.0
  %v235 = vadd.f32 %v233, %v234
  %v236 = vsel %vm89, %v230, 0.0
  %v237 = vadd.f32 %v235, %v236
  %v238 = vrot.slane %v237, 4
  %v239 = vadd.f32 %v237, %v238
  %v240 = vrot.slane %v239, 2
  %v241 = vadd.f32 %v239, %v240
  %v242 = vrot.slane %v241, 1
  %v243 = vadd.f32 %v241, %v242
  %v244 = vmul.f32 %v243, 0.03125
  %v245 = vmul.f32 %v226, %v226
  %v246 = vsub.f32 %v244, %v245
  %v247 = vadd.f32 %v246, 1e-05
  %v248 = vrsqrt.pop %v247
  %v249 = vmul.f32 %v211, %v248
  %v250 = vmul.f32 %v249, %v226
  %v251 = vsub.f32 %v212, %v250
  %v253 = vlaneseq
  %v254 = vshrl.u32 %v253, 7
  %v255 = vsub.s32 0, %v254
  %v256 = vrot.slane %v249, %v255
  %v258 = vmul.f32 %v180, %v256
  %v259 = vmul.f32 %v185, %v256
  %v260 = vmul.f32 %v190, %v256
  %v261 = vmul.f32 %v195, %v256
  %v263 = vlaneseq
  %v264 = vshrl.u32 %v263, 7
  %v265 = vsub.s32 0, %v264
  %v266 = vrot.slane %v251, %v265
  %v268 = vadd.f32 %v258, %v266
  %v269 = vadd.f32 %v259, %v266
  %v270 = vadd.f32 %v260, %v266
  %v271 = vadd.f32 %v261, %v266
  %v272 = vmax.f32 %v268, 0.0
  %v273 = vmax.f32 %v269, 0.0
  %v274 = vmax.f32 %v270, 0.0
  %v275 = vmax.f32 %v271, 0.0
  %276 = vst.msk [vmem:[#allocation2 + $0x8] sm:$0xff] %vm89, %v272
  %277 = vst.msk [vmem:[#allocation2 + $0x10] sm:$0xff] %vm89, %v273
  %278 = vst.msk [vmem:[#allocation2 + $0x20] sm:$0xff] %vm89, %v274
  %279 = vst.msk [vmem:[#allocation2 + $0x28] sm:$0xff] %vm89, %v275
  %v280 = vld [vmem:[#allocation2 + $0x6] sm:$0xff]
  %v281 = vld [vmem:[#allocation2 + $0xe] sm:$0xff]
  %v282 = vld [vmem:[#allocation2 + $0x1e] sm:$0xff]
  %v283 = vld [vmem:[#allocation2 + $0x26] sm:$0xff]
  %v284 = vld [vmem:[#allocation2 + $0x7] sm:$0xff]
  %v285 = vld [vmem:[#allocation2 + $0xf] sm:$0xff]
  %v286 = vld [vmem:[#allocation2 + $0x1f] sm:$0xff]
  %v287 = vld [vmem:[#allocation2 + $0x27] sm:$0xff]
  %v288 = vld [vmem:[#allocation2 + $0x8] sm:$0xff]
  %v289 = vld [vmem:[#allocation2 + $0x10] sm:$0xff]
  %v290 = vld [vmem:[#allocation2 + $0x20] sm:$0xff]
  %v291 = vld [vmem:[#allocation2 + $0x28] sm:$0xff]
  %296 = vrot.lane.b32.xlu0 %v284, 8
  %v297 = vpop.permute.xlu0 %296
  %298 = vrot.lane.b32.xlu0 %v285, 8
  %v299 = vpop.permute.xlu0 %298
  %300 = vrot.lane.b32.xlu0 %v286, 8
  %v301 = vpop.permute.xlu0 %300
  %302 = vrot.lane.b32.xlu0 %v287, 8
  %v303 = vpop.permute.xlu0 %302
  %312 = vrot.lane.b32.xlu0 %v288, 16
  %v313 = vpop.permute.xlu0 %312
  %314 = vrot.lane.b32.xlu0 %v289, 16
  %v315 = vpop.permute.xlu0 %314
  %316 = vrot.lane.b32.xlu0 %v290, 16
  %v317 = vpop.permute.xlu0 %316
  %318 = vrot.lane.b32.xlu0 %v291, 16
  %v319 = vpop.permute.xlu0 %318
  %v324 = vsel %vm89, %v280, %v297
  %v325 = vsel %vm89, %v281, %v299
  %v326 = vsel %vm89, %v282, %v301
  %v327 = vsel %vm89, %v283, %v303
  %vm328 = vcmask 130048
  %v329 = vsel %vm328, %v324, %v313
  %v330 = vsel %vm328, %v325, %v315
  %v331 = vsel %vm328, %v326, %v317
  %v332 = vsel %vm328, %v327, %v319
  %v333 = vld [vmem:[%s2] sm:$0xff]
  %v334 = vld [vmem:[%s2 + $0x8] sm:$0xff]
  %v335 = vld [vmem:[%s2 + $0x10] sm:$0xff]
  %vm336 = vcmask 195584
  %v338 = vsel %vm336, %v329, 0
  %v341 = vsel %vm336, %v330, 0
  %v344 = vsel %vm336, %v331, 0
  %v347 = vsel %vm336, %v332, 0
  %349 = vmatprep.subr.mxu0 0.0
  %350 = vmatpush1.msra.mxu0 %v333
  %351 = vmatprep.subr.mxu0 0.0
  %352 = vmatpush1.msra.mxu0 %v334
  %353 = vmatprep.subr.mxu0 0.0
  %354 = vmatpush1.msra.mxu0 %v335
  %355 = vmatprep.subr.mxu0 0.0
  %356 = vmatpush1.msra.mxu0 0.0
  %357 = vmatprep.subr.mxu0 0.0
  %358 = vmatpush1.msra.mxu0 0.0
  %359 = vmatprep.subr.mxu0 0.0
  %360 = vmatpush1.msra.mxu0 0.0
  %361 = vmatprep.subr.mxu0 0.0
  %362 = vmatpush1.msra.mxu0 0.0
  %363 = vmatprep.subr.mxu0 0.0
  %364 = vmatpush1.msra.mxu0 0.0
  %365 = vmatprep.subr.mxu0 0.0
  %366 = vmatpush1.msra.mxu0 0.0
  %367 = vmatprep.subr.mxu0 0.0
  %368 = vmatpush1.msra.mxu0 0.0
  %369 = vmatprep.subr.mxu0 0.0
  %370 = vmatpush1.msra.mxu0 0.0
  %371 = vmatprep.subr.mxu0 0.0
  %372 = vmatpush1.msra.mxu0 0.0
  %373 = vmatprep.subr.mxu0 0.0
  %374 = vmatpush1.msra.mxu0 0.0
  %375 = vmatprep.subr.mxu0 0.0
  %376 = vmatpush1.msra.mxu0 0.0
  %377 = vmatprep.subr.mxu0 0.0
  %378 = vmatpush1.msra.mxu0 0.0
  %379 = vmatprep.subr.mxu0 0.0
  %380 = vmatpush1.msra.mxu0 0.0
  %381 = vmatprep.subr.mxu0 0.0
  %382 = vmatpush1.msra.mxu0 0.0
  %383 = vmatprep.subr.mxu0 0.0
  %384 = vmatpush1.msra.mxu0 0.0
  %385 = vmatprep.subr.mxu0 0.0
  %386 = vmatpush1.msra.mxu0 0.0
  %387 = vmatprep.subr.mxu0 0.0
  %388 = vmatpush1.msra.mxu0 0.0
  %389 = vmatprep.subr.mxu0 0.0
  %390 = vmatpush1.msra.mxu0 0.0
  %391 = vmatprep.subr.mxu0 0.0
  %392 = vmatpush1.msra.mxu0 0.0
  %393 = vmatprep.subr.mxu0 0.0
  %394 = vmatpush1.msra.mxu0 0.0
  %395 = vmatprep.subr.mxu0 0.0
  %396 = vmatpush1.msra.mxu0 0.0
  %397 = vmatprep.subr.mxu0 0.0
  %398 = vmatpush1.msra.mxu0 0.0
  %399 = vmatprep.subr.mxu0 0.0
  %400 = vmatpush1.msra.mxu0 0.0
  %401 = vmatprep.subr.mxu0 0.0
  %402 = vmatpush1.msra.mxu0 0.0
  %403 = vmatprep.subr.mxu0 0.0
  %404 = vmatpush1.msra.mxu0 0.0
  %405 = vmatprep.subr.mxu0 0.0
  %406 = vmatpush1.msra.mxu0 0.0
  %407 = vmatprep.subr.mxu0 0.0
  %408 = vmatpush1.msra.mxu0 0.0
  %409 = vmatprep.subr.mxu0 0.0
  %410 = vmatpush1.msra.mxu0 0.0
  %411 = vmatprep.subr.mxu0 0.0
  %412 = vmatpush1.msra.mxu0 0.0
  %413 = vmatprep.mubr.f32.mxu0 0.0
  %414 = vmatmul.mubr.f32.gmra.mrb[0].mxu0 %v338
  %v415 = vpop.f32.mrb[0].mxu0
  %v416 = vadd.f32 0.0, %v415
  %v417 = vpop.f32.mrb[0].mxu0
  %418 = vmatprep.mubr.f32.mxu0 0.0
  %419 = vmatmul.mubr.f32.gmra.mrb[0].mxu0 %v341
  %v420 = vpop.f32.mrb[0].mxu0
  %v421 = vadd.f32 0.0, %v420
  %v422 = vpop.f32.mrb[0].mxu0
  %423 = vmatprep.mubr.f32.mxu0 0.0
  %424 = vmatmul.mubr.f32.gmra.mrb[0].mxu0 %v344
  %v425 = vpop.f32.mrb[0].mxu0
  %v426 = vadd.f32 0.0, %v425
  %v427 = vpop.f32.mrb[0].mxu0
  %428 = vmatprep.mubr.f32.mxu0 0.0
  %429 = vmatmul.mubr.f32.gmra.mrb[0].mxu0 %v347
  %v430 = vpop.f32.mrb[0].mxu0
  %v431 = vadd.f32 0.0, %v430
  %v432 = vpop.f32.mrb[0].mxu0
  %433 = vdwg.mxu0
  %v434 = vld [vmem:[%s5] sm:$0x1]
  %v435 = vld [vmem:[%s6] sm:$0x1]
  %v436 = vsel %vm89, %v416, 0.0
  %v437 = vsel %vm89, %v421, 0.0
  %v438 = vadd.f32 %v436, %v437
  %v439 = vsel %vm89, %v426, 0.0
  %v440 = vadd.f32 %v438, %v439
  %v441 = vsel %vm89, %v431, 0.0
  %v442 = vadd.f32 %v440, %v441
  %v443 = vrot.slane %v442, 4
  %v444 = vadd.f32 %v442, %v443
  %v445 = vrot.slane %v444, 2
  %v446 = vadd.f32 %v444, %v445
  %v447 = vrot.slane %v446, 1
  %v448 = vadd.f32 %v446, %v447
  %v449 = vmul.f32 %v448, 0.03125
  %v450 = vmul.f32 %v416, %v416
  %v451 = vmul.f32 %v421, %v421
  %v452 = vmul.f32 %v426, %v426
  %v453 = vmul.f32 %v431, %v431
  %v454 = vsel %vm89, %v450, 0.0
  %v455 = vsel %vm89, %v451, 0.0
  %v456 = vadd.f32 %v454, %v455
  %v457 = vsel %vm89, %v452, 0.0
  %v458 = vadd.f32 %v456, %v457
  %v459 = vsel %vm89, %v453, 0.0
  %v460 = vadd.f32 %v458, %v459
  %v461 = vrot.slane %v460, 4
  %v462 = vadd.f32 %v460, %v461
  %v463 = vrot.slane %v462, 2
  %v464 = vadd.f32 %v462, %v463
  %v465 = vrot.slane %v464, 1
  %v466 = vadd.f32 %v464, %v465
  %v467 = vmul.f32 %v466, 0.03125
  %v468 = vmul.f32 %v449, %v449
  %v469 = vsub.f32 %v467, %v468
  %v470 = vadd.f32 %v469, 1e-05
  %v471 = vrsqrt.pop %v470
  %v472 = vmul.f32 %v434, %v471
  %v473 = vmul.f32 %v472, %v449
  %v474 = vsub.f32 %v435, %v473
  %v476 = vlaneseq
  %v477 = vshrl.u32 %v476, 7
  %v478 = vsub.s32 0, %v477
  %v479 = vrot.slane %v472, %v478
  %v481 = vmul.f32 %v416, %v479
  %v482 = vmul.f32 %v421, %v479
  %v483 = vmul.f32 %v426, %v479
  %v484 = vmul.f32 %v431, %v479
  %v486 = vlaneseq
  %v487 = vshrl.u32 %v486, 7
  %v488 = vsub.s32 0, %v487
  %v489 = vrot.slane %v474, %v488
  %v491 = vadd.f32 %v481, %v489
  %v492 = vadd.f32 %v482, %v489
  %v493 = vadd.f32 %v483, %v489
  %v494 = vadd.f32 %v484, %v489
  %499 = vrot.lane.b32.xlu0 %v207, 120
  %v500 = vpop.permute.xlu0 %499
  %501 = vrot.lane.b32.xlu0 %v208, 120
  %v502 = vpop.permute.xlu0 %501
  %503 = vrot.lane.b32.xlu0 %v209, 120
  %v504 = vpop.permute.xlu0 %503
  %505 = vrot.lane.b32.xlu0 %v210, 120
  %v506 = vpop.permute.xlu0 %505
  %v511 = vadd.f32 %v491, %v500
  %v512 = vadd.f32 %v492, %v502
  %v513 = vadd.f32 %v493, %v504
  %v514 = vadd.f32 %v494, %v506
  %v515 = vmax.f32 %v511, 0.0
  %v516 = vmax.f32 %v512, 0.0
  %v517 = vmax.f32 %v513, 0.0
  %v518 = vmax.f32 %v514, 0.0
  %519 = vst.msk [vmem:[%s8] sm:$0xff] %vm89, %v515
  %520 = vst.msk [vmem:[%s8 + $0x8] sm:$0xff] %vm89, %v516
  %521 = vst.msk [vmem:[%s8 + $0x10] sm:$0xff] %vm89, %v517
  %522 = vst.msk [vmem:[%s8 + $0x18] sm:$0xff] %vm89, %v518
  // Predicated region
  $region34: #{tpu_custom_call.1} parent=0 // pred_check
    _
  $region35: #{tpu_custom_call.1} parent=0 // pred_check_branch
    %524 = sbr.rel (0) target = $region37
  $region36: #{tpu_custom_call.1} parent=0 // pred_region
    _
  $region37: #{tpu_custom_call.1} parent=0 // pred_fallthru
    _
  // Predicated region
  $region38: #{tpu_custom_call.1} parent=0 // pred_check
    _
  $region39: #{tpu_custom_call.1} parent=0 // pred_check_branch
    %526 = sbr.rel (0) target = $region41
  $region40: #{tpu_custom_call.1} parent=0 // pred_region
    _
  $region41: #{tpu_custom_call.1} parent=0 // pred_fallthru
    _

</llo_original>
